<compile_context>
chip_gen: v5e
topology: v5e:2x2
jax: 0.10.0
libtpu: 0.0.40
codegen_flags: <defaults>
</compile_context>

<pallas_src>
import functools

import jax
import jax.numpy as jnp
from jax.experimental import pallas as pl
from jax.experimental.pallas import tpu as pltpu


def conv3x3_kernel(x_ref, w_ref, b_ref, o_ref, xp_ref, *, W, blk, lpad, nh):
    """One (batch, row-block) step of a 3x3 / stride-1 / pad-1 convolution.

    x_ref:  (1, Cin, H*W)          flat NCHW input, resident across row-blocks
    w_ref:  (9, Cout, Cin)         taps, w_ref[dy*3+dx] == weight[:, :, dy, dx]
    b_ref:  (Cout, 1)              bias column (f32)
    o_ref:  (1, Cout, blk)         this row-block's flat output (lane-dense)
    xp_ref: (Cin, lpad+blk+W+1)    zero-bordered halo scratch (TH+2 rows only)
    """
    Cin = x_ref.shape[1]

    r = pl.program_id(1)
    col0 = r * blk
    if blk % 128 == 0:
        col0 = pl.multiple_of(col0, 128)

    # --- Halo copy: only this block's TH+2 rows land in the scratch. -------
    # Zero both halo strips (plus one guard column on each side, read only by
    # the masked corner taps), then overwrite with real image rows where they
    # exist. Out-of-image ROWS therefore read back as zeros.
    zeros_halo = jnp.zeros((Cin, W + 1), xp_ref.dtype)
    xp_ref[:, lpad - W - 1:lpad] = zeros_halo
    xp_ref[:, lpad + blk:lpad + blk + W + 1] = zeros_halo
    # Center TH rows (always in-image); 128-lane-aligned store.
    xp_ref[:, lpad:lpad + blk] = x_ref[0, :, pl.ds(col0, blk)].astype(xp_ref.dtype)
    if nh > 1:
        @pl.when(r > 0)
        def _():
            xp_ref[:, lpad - W:lpad] = (
                x_ref[0, :, pl.ds(col0 - W, W)].astype(xp_ref.dtype))

        @pl.when(r < nh - 1)
        def _():
            xp_ref[:, lpad + blk:lpad + blk + W] = (
                x_ref[0, :, pl.ds(col0 + blk, W)].astype(xp_ref.dtype))

    # Column index within each image row; masks kill the 1-pixel COLUMN wrap
    # across image rows (padding=1 in W). Hoisted out of the tap loop.
    w_idx = jax.lax.broadcasted_iota(jnp.int32, (1, blk), 1) % W
    not_left = w_idx >= 1          # dx = 0 tap: column 0 is padding
    not_right = w_idx <= W - 2     # dx = 2 tap: column W-1 is padding

    # Nine (Cout, Cin) @ (Cin, blk) dots accumulated in f32 registers; no
    # materialized im2col patch matrix (vst-slot relief at small channels).
    acc = b_ref[...] + jnp.zeros(o_ref.shape[1:], jnp.float32)   # (Cout, blk)
    for dy in range(3):
        for dx in range(3):
            t = dy * 3 + dx
            shift = (dy - 1) * W + (dx - 1)
            vals = xp_ref[:, lpad + shift:lpad + shift + blk]    # (Cin, blk)
            if dx == 0:
                vals = jnp.where(not_left, vals, 0)
            elif dx == 2:
                vals = jnp.where(not_right, vals, 0)
            acc = acc + jnp.dot(w_ref[t], vals,
                                preferred_element_type=jnp.float32)
    o_ref[0] = acc.astype(o_ref.dtype)


def _pick_row_block(H, W, Cin, Cout, itemsize, batch):
    """Rows per grid step.

    Small images: one fat block per batch (per-grid-step overhead ~0.35us
    dominates and there is nothing useful to pipeline); keep >=2 total steps
    only if the batch alone cannot provide them (v7x megacore). Larger
    images: the largest divisor TH of H whose blk = TH*W is a multiple of 256
    (2x256 MXU width on v6e/v7x; 128 fallback) with the per-step working set
    well under the smallest default scoped VMEM (v5e: 16 MiB).
    """
    HW = H * W
    if (Cin + Cout) * HW * itemsize <= (2 << 20):
        if batch >= 2 or H % 2 != 0 or ((H // 2) * W) % 128 != 0:
            return H
        return H // 2
    budget = 6 << 20
    for mult in (256, 128):
        cands = [t for t in range(1, H + 1)
                 if H % t == 0 and (t * W) % mult == 0
                 and 3 * (Cin + Cout) * t * W * itemsize <= budget]
        if cands:
            return max(cands)
    return H


def conv3x3(x_nchw, weight, bias, *, compute_dtype=None):
    """3x3 conv, stride 1, padding 1, matching nn.Conv2d semantics.

    x_nchw: (B, Cin, H, W) float32
    weight: (Cout, Cin, 3, 3)
    bias:   (Cout,)
    compute_dtype: optional operand dtype (e.g. jnp.bfloat16 on v6e/v7x);
        accumulation stays float32. Default: x dtype (exact path, v5e-safe).
    returns (B, Cout, H, W)
    """
    B, Cin, H, W = x_nchw.shape
    Cout = weight.shape[0]
    HW = H * W

    cdtype = (jnp.dtype(compute_dtype) if compute_dtype is not None
              else x_nchw.dtype)
    TH = _pick_row_block(H, W, Cin, Cout, jnp.dtype(cdtype).itemsize, B)
    NH = H // TH
    BLK = TH * W
    LPAD = -(-(W + 1) // 128) * 128        # 128-aligned center offset, >= W+1
    P = LPAD + BLK + W + 1                 # halo scratch width (VMEM only)

    # Free, row-major reshapes of the image only — no transposes, no HBM pad.
    x_flat = x_nchw.reshape(B, Cin, HW).astype(cdtype)
    # (Cout, Cin, 3, 3) -> (9, Cout, Cin): w3d[dy*3+dx] == weight[:, :, dy, dx].
    w3d = jnp.transpose(weight, (2, 3, 0, 1)).reshape(9, Cout, Cin).astype(cdtype)
    b2d = bias.reshape(Cout, 1).astype(jnp.float32)

    kernel = functools.partial(conv3x3_kernel, W=W, blk=BLK, lpad=LPAD, nh=NH)

    out_flat = pl.pallas_call(
        kernel,
        out_shape=jax.ShapeDtypeStruct((B, Cout, HW), x_nchw.dtype),
        grid_spec=pltpu.PrefetchScalarGridSpec(
            num_scalar_prefetch=0,
            grid=(B, NH),
            in_specs=[
                # Image: resident across the row-block axis (index ignores r).
                pl.BlockSpec((1, Cin, HW), lambda b, r: (b, 0, 0)),
                # Weights / bias: constant index_map -> fetched once, resident.
                pl.BlockSpec((9, Cout, Cin), lambda b, r: (0, 0, 0)),
                pl.BlockSpec((Cout, 1), lambda b, r: (0, 0)),
            ],
            out_specs=pl.BlockSpec((1, Cout, BLK), lambda b, r: (b, 0, r)),
            scratch_shapes=[
                pltpu.VMEM((Cin, P), cdtype),   # zero-bordered halo scratch
            ],
        ),
        compiler_params=pltpu.CompilerParams(
            dimension_semantics=("parallel", "parallel"),
        ),
    )(x_flat, w3d, b2d)

    # Free reshape back to NCHW (the (Cout, blk) output is already NCHW order).
    return out_flat.reshape(B, Cout, H, W)


if __name__ == "__main__":
    # Small shapes consistent with the module: batch=2, in_channels=4,
    # out_channels=8, spatial=16.
    B, Cin, Cout, H, W = 2, 4, 8, 16, 16

    key = jax.random.PRNGKey(0)
    kx, kw, kb = jax.random.split(key, 3)

    x = jax.random.normal(kx, (B, Cin, H, W), dtype=jnp.float32)

    # Deterministic init mimicking nn.Conv2d default (kaiming-uniform bounds).
    fan_in = Cin * 3 * 3
    bound = 1.0 / (fan_in ** 0.5)
    weight = jax.random.uniform(kw, (Cout, Cin, 3, 3), jnp.float32,
                                minval=-bound, maxval=bound)
    bias = jax.random.uniform(kb, (Cout,), jnp.float32,
                              minval=-bound, maxval=bound)

    out = conv3x3(x, weight, bias)
    out = jax.block_until_ready(out)

    # Silent correctness check against XLA's native conv (NCHW, pad=1).
    ref = jax.lax.conv_general_dilated(
        x, weight, window_strides=(1, 1), padding=((1, 1), (1, 1)),
        dimension_numbers=("NCHW", "OIHW", "NCHW"),
    ) + bias.reshape(1, Cout, 1, 1)
    assert out.shape == (B, Cout, H, W)
    assert jnp.allclose(out, ref, atol=1e-4, rtol=1e-4)

    print("KERNEL_OK")
</pallas_src>

<mosaic_0001>
module attributes {stable_mosaic.version = 11 : i64} {
  func.func @conv3x3_kernel(%arg0: i32, %arg1: i32, %arg2: memref<1x4x256xf32, #tpu.memory_space<vmem>>, %arg3: memref<9x8x4xf32, #tpu.memory_space<vmem>>, %arg4: memref<8x1xf32, #tpu.memory_space<vmem>>, %arg5: memref<1x8x256xf32, #tpu.memory_space<vmem>>, %arg6: memref<4x401xf32, #tpu.memory_space<vmem>>) attributes {dimension_semantics = [#tpu.dimension_semantics<parallel>, #tpu.dimension_semantics<parallel>], iteration_bounds = array<i64: 2, 1>, scalar_prefetch = 0 : i64, scratch_operands = 1 : i64, tpu.core_type = #tpu.core_type<tc>, window_params = [{transform_indices = @transform_0, window_bounds = array<i64: 1, 4, 256>}, {pipeline_mode = #tpu.pipeline_mode<synchronous>, transform_indices = @transform_1, window_bounds = array<i64: 9, 8, 4>}, {pipeline_mode = #tpu.pipeline_mode<synchronous>, transform_indices = @transform_2, window_bounds = array<i64: 8, 1>}, {transform_indices = @transform_3, window_bounds = array<i64: 1, 8, 256>}]} {
    %c256_i32 = arith.constant 256 : i32
    %0 = arith.muli %arg1, %c256_i32 : i32
    %1 = tpu.assume_multiple %0, 128 : i32
    %cst = arith.constant 0.000000e+00 : f32
    %2 = vector.broadcast %cst : f32 to vector<4x17xf32>
    %c0 = arith.constant 0 : index
    %c111 = arith.constant 111 : index
    %3 = vector.load %arg6[%c0, %c111] : memref<4x401xf32, #tpu.memory_space<vmem>>, vector<4x17xf32>
    tpu.vector_store %arg6[%c0, %c111], %2 {strides = array<i32>} : memref<4x401xf32, #tpu.memory_space<vmem>>, vector<4x17xf32>,
    %c0_0 = arith.constant 0 : index
    %c384 = arith.constant 384 : index
    %4 = vector.load %arg6[%c0_0, %c384] : memref<4x401xf32, #tpu.memory_space<vmem>>, vector<4x17xf32>
    tpu.vector_store %arg6[%c0_0, %c384], %2 {strides = array<i32>} : memref<4x401xf32, #tpu.memory_space<vmem>>, vector<4x17xf32>,
    %c0_1 = arith.constant 0 : index
    %c0_2 = arith.constant 0 : index
    %5 = arith.index_cast %1 : i32 to index
    %6 = vector.load %arg2[%c0_1, %c0_2, %5] : memref<1x4x256xf32, #tpu.memory_space<vmem>>, vector<1x4x256xf32>
    %7 = vector.shape_cast %6 : vector<1x4x256xf32> to vector<4x256xf32>
    %c0_3 = arith.constant 0 : index
    %c128 = arith.constant 128 : index
    %8 = vector.load %arg6[%c0_3, %c128] : memref<4x401xf32, #tpu.memory_space<vmem>>, vector<4x256xf32>
    tpu.vector_store %arg6[%c0_3, %c128], %7 {strides = array<i32>} : memref<4x401xf32, #tpu.memory_space<vmem>>, vector<4x256xf32>,
    %9 = tpu.iota {dimensions = array<i32: 1>} : vector<1x256xi32>
    %c16_i32 = arith.constant 16 : i32
    %c0_i32 = arith.constant 0 : i32
    %10 = arith.cmpi eq, %c16_i32, %c0_i32 : i32
    %c1_i32 = arith.constant 1 : i32
    %11 = arith.select %10, %c1_i32, %c16_i32 : i32
    %12 = vector.broadcast %11 : i32 to vector<1x256xi32>
    %13 = arith.remsi %9, %12 : vector<1x256xi32>
    %c0_i32_4 = arith.constant 0 : i32
    %14 = vector.broadcast %c0_i32_4 : i32 to vector<1x256xi32>
    %15 = arith.cmpi ne, %13, %14 : vector<1x256xi32>
    %c0_i32_5 = arith.constant 0 : i32
    %16 = vector.broadcast %c0_i32_5 : i32 to vector<1x256xi32>
    %17 = arith.cmpi slt, %13, %16 : vector<1x256xi32>
    %c0_i32_6 = arith.constant 0 : i32
    %18 = arith.cmpi slt, %11, %c0_i32_6 : i32
    %19 = vector.broadcast %18 : i1 to vector<1x256xi1>
    %20 = vector.broadcast %19 : vector<1x256xi1> to vector<1x256xi1>
    %21 = arith.xori %17, %20 : vector<1x256xi1>
    %22 = arith.andi %21, %15 : vector<1x256xi1>
    %23 = vector.broadcast %11 : i32 to vector<1x256xi32>
    %24 = arith.addi %13, %23 : vector<1x256xi32>
    %25 = arith.select %22, %24, %13 : vector<1x256xi1>, vector<1x256xi32>
    %c1_i32_7 = arith.constant 1 : i32
    %26 = vector.broadcast %c1_i32_7 : i32 to vector<1x256xi32>
    %27 = arith.cmpi sge, %25, %26 : vector<1x256xi32>
    %c14_i32 = arith.constant 14 : i32
    %28 = vector.broadcast %c14_i32 : i32 to vector<1x256xi32>
    %29 = arith.cmpi sle, %25, %28 : vector<1x256xi32>
    %c0_8 = arith.constant 0 : index
    %c0_9 = arith.constant 0 : index
    %30 = vector.load %arg4[%c0_8, %c0_9] : memref<8x1xf32, #tpu.memory_space<vmem>>, vector<8x1xf32>
    %cst_10 = arith.constant 0.000000e+00 : f32
    %31 = vector.broadcast %cst_10 : f32 to vector<8x256xf32>
    %32 = vector.broadcast %30 : vector<8x1xf32> to vector<8x256xf32>
    %33 = arith.addf %32, %31 : vector<8x256xf32>
    %c0_11 = arith.constant 0 : index
    %c111_12 = arith.constant 111 : index
    %34 = vector.load %arg6[%c0_11, %c111_12] : memref<4x401xf32, #tpu.memory_space<vmem>>, vector<4x256xf32>
    %c0_i32_13 = arith.constant 0 : i32
    %35 = arith.sitofp %c0_i32_13 : i32 to f32
    %36 = vector.shape_cast %27 : vector<1x256xi1> to vector<1x256xi1>
    %37 = vector.broadcast %36 : vector<1x256xi1> to vector<4x256xi1>
    %38 = vector.broadcast %35 : f32 to vector<4x256xf32>
    %39 = arith.select %37, %34, %38 : vector<4x256xi1>, vector<4x256xf32>
    %c0_14 = arith.constant 0 : index
    %c0_15 = arith.constant 0 : index
    %c0_16 = arith.constant 0 : index
    %40 = vector.load %arg3[%c0_14, %c0_15, %c0_16] : memref<9x8x4xf32, #tpu.memory_space<vmem>>, vector<1x8x4xf32>
    %41 = vector.shape_cast %40 : vector<1x8x4xf32> to vector<8x4xf32>
    %cst_17 = arith.constant dense<0.000000e+00> : vector<8x256xf32>
    %42 = tpu.matmul %41, %39, %cst_17 {dimension_numbers = #tpu.dot_dimension_numbers<[1], [0], [0], [1], [0, 0, 1, 1], [], []>} : vector<8x4xf32>, vector<4x256xf32>, vector<8x256xf32> -> vector<8x256xf32>
    %43 = arith.addf %33, %42 : vector<8x256xf32>
    %c0_18 = arith.constant 0 : index
    %c112 = arith.constant 112 : index
    %44 = vector.load %arg6[%c0_18, %c112] : memref<4x401xf32, #tpu.memory_space<vmem>>, vector<4x256xf32>
    %c1 = arith.constant 1 : index
    %c0_19 = arith.constant 0 : index
    %c0_20 = arith.constant 0 : index
    %45 = vector.load %arg3[%c1, %c0_19, %c0_20] : memref<9x8x4xf32, #tpu.memory_space<vmem>>, vector<1x8x4xf32>
    %46 = vector.shape_cast %45 : vector<1x8x4xf32> to vector<8x4xf32>
    %cst_21 = arith.constant dense<0.000000e+00> : vector<8x256xf32>
    %47 = tpu.matmul %46, %44, %cst_21 {dimension_numbers = #tpu.dot_dimension_numbers<[1], [0], [0], [1], [0, 0, 1, 1], [], []>} : vector<8x4xf32>, vector<4x256xf32>, vector<8x256xf32> -> vector<8x256xf32>
    %48 = arith.addf %43, %47 : vector<8x256xf32>
    %c0_22 = arith.constant 0 : index
    %c113 = arith.constant 113 : index
    %49 = vector.load %arg6[%c0_22, %c113] : memref<4x401xf32, #tpu.memory_space<vmem>>, vector<4x256xf32>
    %c0_i32_23 = arith.constant 0 : i32
    %50 = arith.sitofp %c0_i32_23 : i32 to f32
    %51 = vector.shape_cast %29 : vector<1x256xi1> to vector<1x256xi1>
    %52 = vector.broadcast %51 : vector<1x256xi1> to vector<4x256xi1>
    %53 = vector.broadcast %50 : f32 to vector<4x256xf32>
    %54 = arith.select %52, %49, %53 : vector<4x256xi1>, vector<4x256xf32>
    %c2 = arith.constant 2 : index
    %c0_24 = arith.constant 0 : index
    %c0_25 = arith.constant 0 : index
    %55 = vector.load %arg3[%c2, %c0_24, %c0_25] : memref<9x8x4xf32, #tpu.memory_space<vmem>>, vector<1x8x4xf32>
    %56 = vector.shape_cast %55 : vector<1x8x4xf32> to vector<8x4xf32>
    %cst_26 = arith.constant dense<0.000000e+00> : vector<8x256xf32>
    %57 = tpu.matmul %56, %54, %cst_26 {dimension_numbers = #tpu.dot_dimension_numbers<[1], [0], [0], [1], [0, 0, 1, 1], [], []>} : vector<8x4xf32>, vector<4x256xf32>, vector<8x256xf32> -> vector<8x256xf32>
    %58 = arith.addf %48, %57 : vector<8x256xf32>
    %c0_27 = arith.constant 0 : index
    %c127 = arith.constant 127 : index
    %59 = vector.load %arg6[%c0_27, %c127] : memref<4x401xf32, #tpu.memory_space<vmem>>, vector<4x256xf32>
    %c0_i32_28 = arith.constant 0 : i32
    %60 = arith.sitofp %c0_i32_28 : i32 to f32
    %61 = vector.shape_cast %27 : vector<1x256xi1> to vector<1x256xi1>
    %62 = vector.broadcast %61 : vector<1x256xi1> to vector<4x256xi1>
    %63 = vector.broadcast %60 : f32 to vector<4x256xf32>
    %64 = arith.select %62, %59, %63 : vector<4x256xi1>, vector<4x256xf32>
    %c3 = arith.constant 3 : index
    %c0_29 = arith.constant 0 : index
    %c0_30 = arith.constant 0 : index
    %65 = vector.load %arg3[%c3, %c0_29, %c0_30] : memref<9x8x4xf32, #tpu.memory_space<vmem>>, vector<1x8x4xf32>
    %66 = vector.shape_cast %65 : vector<1x8x4xf32> to vector<8x4xf32>
    %cst_31 = arith.constant dense<0.000000e+00> : vector<8x256xf32>
    %67 = tpu.matmul %66, %64, %cst_31 {dimension_numbers = #tpu.dot_dimension_numbers<[1], [0], [0], [1], [0, 0, 1, 1], [], []>} : vector<8x4xf32>, vector<4x256xf32>, vector<8x256xf32> -> vector<8x256xf32>
    %68 = arith.addf %58, %67 : vector<8x256xf32>
    %c0_32 = arith.constant 0 : index
    %c128_33 = arith.constant 128 : index
    %69 = vector.load %arg6[%c0_32, %c128_33] : memref<4x401xf32, #tpu.memory_space<vmem>>, vector<4x256xf32>
    %c4 = arith.constant 4 : index
    %c0_34 = arith.constant 0 : index
    %c0_35 = arith.constant 0 : index
    %70 = vector.load %arg3[%c4, %c0_34, %c0_35] : memref<9x8x4xf32, #tpu.memory_space<vmem>>, vector<1x8x4xf32>
    %71 = vector.shape_cast %70 : vector<1x8x4xf32> to vector<8x4xf32>
    %cst_36 = arith.constant dense<0.000000e+00> : vector<8x256xf32>
    %72 = tpu.matmul %71, %69, %cst_36 {dimension_numbers = #tpu.dot_dimension_numbers<[1], [0], [0], [1], [0, 0, 1, 1], [], []>} : vector<8x4xf32>, vector<4x256xf32>, vector<8x256xf32> -> vector<8x256xf32>
    %73 = arith.addf %68, %72 : vector<8x256xf32>
    %c0_37 = arith.constant 0 : index
    %c129 = arith.constant 129 : index
    %74 = vector.load %arg6[%c0_37, %c129] : memref<4x401xf32, #tpu.memory_space<vmem>>, vector<4x256xf32>
    %c0_i32_38 = arith.constant 0 : i32
    %75 = arith.sitofp %c0_i32_38 : i32 to f32
    %76 = vector.shape_cast %29 : vector<1x256xi1> to vector<1x256xi1>
    %77 = vector.broadcast %76 : vector<1x256xi1> to vector<4x256xi1>
    %78 = vector.broadcast %75 : f32 to vector<4x256xf32>
    %79 = arith.select %77, %74, %78 : vector<4x256xi1>, vector<4x256xf32>
    %c5 = arith.constant 5 : index
    %c0_39 = arith.constant 0 : index
    %c0_40 = arith.constant 0 : index
    %80 = vector.load %arg3[%c5, %c0_39, %c0_40] : memref<9x8x4xf32, #tpu.memory_space<vmem>>, vector<1x8x4xf32>
    %81 = vector.shape_cast %80 : vector<1x8x4xf32> to vector<8x4xf32>
    %cst_41 = arith.constant dense<0.000000e+00> : vector<8x256xf32>
    %82 = tpu.matmul %81, %79, %cst_41 {dimension_numbers = #tpu.dot_dimension_numbers<[1], [0], [0], [1], [0, 0, 1, 1], [], []>} : vector<8x4xf32>, vector<4x256xf32>, vector<8x256xf32> -> vector<8x256xf32>
    %83 = arith.addf %73, %82 : vector<8x256xf32>
    %c0_42 = arith.constant 0 : index
    %c143 = arith.constant 143 : index
    %84 = vector.load %arg6[%c0_42, %c143] : memref<4x401xf32, #tpu.memory_space<vmem>>, vector<4x256xf32>
    %c0_i32_43 = arith.constant 0 : i32
    %85 = arith.sitofp %c0_i32_43 : i32 to f32
    %86 = vector.shape_cast %27 : vector<1x256xi1> to vector<1x256xi1>
    %87 = vector.broadcast %86 : vector<1x256xi1> to vector<4x256xi1>
    %88 = vector.broadcast %85 : f32 to vector<4x256xf32>
    %89 = arith.select %87, %84, %88 : vector<4x256xi1>, vector<4x256xf32>
    %c6 = arith.constant 6 : index
    %c0_44 = arith.constant 0 : index
    %c0_45 = arith.constant 0 : index
    %90 = vector.load %arg3[%c6, %c0_44, %c0_45] : memref<9x8x4xf32, #tpu.memory_space<vmem>>, vector<1x8x4xf32>
    %91 = vector.shape_cast %90 : vector<1x8x4xf32> to vector<8x4xf32>
    %cst_46 = arith.constant dense<0.000000e+00> : vector<8x256xf32>
    %92 = tpu.matmul %91, %89, %cst_46 {dimension_numbers = #tpu.dot_dimension_numbers<[1], [0], [0], [1], [0, 0, 1, 1], [], []>} : vector<8x4xf32>, vector<4x256xf32>, vector<8x256xf32> -> vector<8x256xf32>
    %93 = arith.addf %83, %92 : vector<8x256xf32>
    %c0_47 = arith.constant 0 : index
    %c144 = arith.constant 144 : index
    %94 = vector.load %arg6[%c0_47, %c144] : memref<4x401xf32, #tpu.memory_space<vmem>>, vector<4x256xf32>
    %c7 = arith.constant 7 : index
    %c0_48 = arith.constant 0 : index
    %c0_49 = arith.constant 0 : index
    %95 = vector.load %arg3[%c7, %c0_48, %c0_49] : memref<9x8x4xf32, #tpu.memory_space<vmem>>, vector<1x8x4xf32>
    %96 = vector.shape_cast %95 : vector<1x8x4xf32> to vector<8x4xf32>
    %cst_50 = arith.constant dense<0.000000e+00> : vector<8x256xf32>
    %97 = tpu.matmul %96, %94, %cst_50 {dimension_numbers = #tpu.dot_dimension_numbers<[1], [0], [0], [1], [0, 0, 1, 1], [], []>} : vector<8x4xf32>, vector<4x256xf32>, vector<8x256xf32> -> vector<8x256xf32>
    %98 = arith.addf %93, %97 : vector<8x256xf32>
    %c0_51 = arith.constant 0 : index
    %c145 = arith.constant 145 : index
    %99 = vector.load %arg6[%c0_51, %c145] : memref<4x401xf32, #tpu.memory_space<vmem>>, vector<4x256xf32>
    %c0_i32_52 = arith.constant 0 : i32
    %100 = arith.sitofp %c0_i32_52 : i32 to f32
    %101 = vector.shape_cast %29 : vector<1x256xi1> to vector<1x256xi1>
    %102 = vector.broadcast %101 : vector<1x256xi1> to vector<4x256xi1>
    %103 = vector.broadcast %100 : f32 to vector<4x256xf32>
    %104 = arith.select %102, %99, %103 : vector<4x256xi1>, vector<4x256xf32>
    %c8 = arith.constant 8 : index
    %c0_53 = arith.constant 0 : index
    %c0_54 = arith.constant 0 : index
    %105 = vector.load %arg3[%c8, %c0_53, %c0_54] : memref<9x8x4xf32, #tpu.memory_space<vmem>>, vector<1x8x4xf32>
    %106 = vector.shape_cast %105 : vector<1x8x4xf32> to vector<8x4xf32>
    %cst_55 = arith.constant dense<0.000000e+00> : vector<8x256xf32>
    %107 = tpu.matmul %106, %104, %cst_55 {dimension_numbers = #tpu.dot_dimension_numbers<[1], [0], [0], [1], [0, 0, 1, 1], [], []>} : vector<8x4xf32>, vector<4x256xf32>, vector<8x256xf32> -> vector<8x256xf32>
    %108 = arith.addf %98, %107 : vector<8x256xf32>
    %c0_56 = arith.constant 0 : index
    %c0_57 = arith.constant 0 : index
    %c0_58 = arith.constant 0 : index
    %109 = vector.load %arg5[%c0_56, %c0_57, %c0_58] : memref<1x8x256xf32, #tpu.memory_space<vmem>>, vector<1x8x256xf32>
    %110 = vector.shape_cast %109 : vector<1x8x256xf32> to vector<8x256xf32>
    %111 = vector.shape_cast %108 : vector<8x256xf32> to vector<1x8x256xf32>
    tpu.vector_store %arg5[%c0_56, %c0_57, %c0_58], %111 {strides = array<i32>} : memref<1x8x256xf32, #tpu.memory_space<vmem>>, vector<1x8x256xf32>,
    return
  }
  func.func @transform_0(%arg0: i32, %arg1: i32) -> (i32, i32, i32) {
    %c0_i32 = arith.constant 0 : i32
    %c0_i32_0 = arith.constant 0 : i32
    %c0_i32_1 = arith.constant 0 : i32
    return %arg0, %c0_i32, %c0_i32_0 : i32, i32, i32
  }
  func.func @transform_1(%arg0: i32, %arg1: i32) -> (i32, i32, i32) {
    %c0_i32 = arith.constant 0 : i32
    %c0_i32_0 = arith.constant 0 : i32
    %c0_i32_1 = arith.constant 0 : i32
    %c0_i32_2 = arith.constant 0 : i32
    return %c0_i32, %c0_i32_0, %c0_i32_1 : i32, i32, i32
  }
  func.func @transform_2(%arg0: i32, %arg1: i32) -> (i32, i32) {
    %c0_i32 = arith.constant 0 : i32
    %c0_i32_0 = arith.constant 0 : i32
    %c0_i32_1 = arith.constant 0 : i32
    return %c0_i32, %c0_i32_0 : i32, i32
  }
  func.func @transform_3(%arg0: i32, %arg1: i32) -> (i32, i32, i32) {
    %c0_i32 = arith.constant 0 : i32
    %c0_i32_0 = arith.constant 0 : i32
    return %arg0, %c0_i32, %arg1 : i32, i32, i32
  }
}

</mosaic_0001>

<llo_original>
// kernel: tpu_custom_call.1
$region0: #{tpu_custom_call.1}
  #allocation0 [shape = 'u32[]', space=smem, size = 0x4, offset = 0x4, fixed_abs, tag = 'smem constant byte address 0x4 - core index']
  #allocation1 [shape = 'u32[72,128]{1,0:T(1,128)}', space=vmem, size = 0x9000, scoped, tag = 'internal scratch']
  #allocation2 [shape = 'f32[4,401]{1,0:T(4,128)}', space=vmem, size = 0x2000, scoped, tag = 'scratch operand']
  %s0 = inlined_call_operand.vmem [shape: f32[2,4,256], index: 0, kind: input, shape index: {}]
  %s1 = inlined_call_operand.vmem [shape: f32[9,8,4], index: 1, kind: input, shape index: {}]
  %s2 = inlined_call_operand.vmem [shape: f32[8,1], index: 2, kind: input, shape index: {}]
  %s3 = inlined_call_operand.hbm [shape: f32[2,8,256], index: 3, kind: output, shape index: {}]
  %s4 = sld [smem:[#allocation0]]
  $region45: #{tpu_custom_call.1} parent=0
    _
  %s6 = ssub.s32 1, %s4
  %s7 = scalar_select 0, %s6, %s4
  $region1: #{tpu_custom_call.1} parent=0
    #allocation3 [shape = 'u8[16384]{0}', space=vmem, size = 0x4000, scoped, tag = 'output window, operand 0']
    #allocation4 [shape = 's32[2]{0}', space=sflag, size = 0x8, scoped, tag = 'scoped memory for tpu_custom_call.1']
    %8 = vsyncpa [#allocation4], 0
    %s9 = scalar_lea.sflag [#allocation4], 1
    %10 = vsyncpa %s9, 0
    loop: start=0, step=1, limit=4
    $region2: #{tpu_custom_call.1} parent=1 // loop_pre_header
      _
    $region3: #{tpu_custom_call.1} parent=1 // loop_header
      %s12 = sphi 0, %s16
      %p13 = scmp.ge.s32.totalorder %s12, 4
      %s19 = sphi 0, %s31
      %s20 = sphi 0, %s27
      %s21 = sphi 0, %s19
      %s22 = sphi 0, %s20
      %s23 = sphi 0, %s21
      %s24 = sphi 0, %s22
      %s34 = sphi 0, %s36
      %s37 = sphi 0, %s34
      %s38 = sphi 0, %s37
      %s54 = sphi 0, %s38
      %s58 = sphi 0, %s58
      %s60 = sphi 0, %s58
      %s61 = sphi 0, %s60
      %s75 = sphi 0, %s61
      %s79 = sphi 0, %s79
      %s81 = sphi 0, %s79
      %s82 = sphi 0, %s81
      %s96 = sphi 0, %s82
      %s104 = sphi 0, %s106
      %s107 = sphi 0, %s104
      %s108 = sphi 0, %s107
      %s124 = sphi 0, %s108
    $region4: #{tpu_custom_call.1} parent=1 // loop_header_branch
      %15 = sbr.rel (%p13) target = $region8
    $region5: #{tpu_custom_call.1} parent=1 // loop_body
      %s17 = ssub.s32 %s12, 1
      %s18 = ssub.s32 %s12, 2
      %s25 = sadd.s32 1, %s20
      %p26 = scmp.ge.s32.totalorder %s25, 1
      %s27 = scalar_select %p26, 0, %s25
      %s28 = sadd.s32 1, %s19
      %s29 = scalar_select %p26, %s28, %s19
      %p30 = scmp.ge.s32.totalorder %s29, 2
      %s31 = scalar_select %p30, 0, %s29
      %s32 = ssub.s32 %s19, %s31
      %p33 = scmp.eq.s32.totalorder %s32, 0
      %s35 = sadd.s32 %s34, 1
      %s36 = scalar_select %p33, %s34, %s35
      %p39 = pneg %p33
      %p40 = scmp.eq.s32.totalorder %s12, 1
      %p41 = por %p39, %p40
      %p42 = scmp.ne.s32.totalorder %s34, %s37
      %p43 = scmp.eq.s32.totalorder %s12, 0
      %p44 = por %p42, %p43
      %p45 = scmp.ne.s32.totalorder %s34, %s37
      %p46 = scmp.eq.s32.totalorder %s17, 1
      %p47 = por %p45, %p46
      %p48 = scmp.ne.s32.totalorder %s37, %s38
      %p49 = scmp.eq.s32.totalorder %s17, 0
      %p50 = por %p48, %p49
      %p51 = scmp.ne.s32.totalorder %s37, %s38
      %p52 = scmp.eq.s32.totalorder %s18, 1
      %p53 = por %p51, %p52
      %p55 = scmp.ne.s32.totalorder %s38, %s54
      %p56 = scmp.eq.s32.totalorder %s18, 0
      %p57 = por %p55, %p56
      %s59 = sadd.s32 %s58, 1
      %p62 = scmp.eq.s32.totalorder %s12, 1
      %p63 = scmp.ne.s32.totalorder %s58, %s60
      %p64 = scmp.eq.s32.totalorder %s12, 0
      %p65 = por %p63, %p64
      %p66 = scmp.ne.s32.totalorder %s58, %s60
      %p67 = scmp.eq.s32.totalorder %s17, 1
      %p68 = por %p66, %p67
      %p69 = scmp.ne.s32.totalorder %s60, %s61
      %p70 = scmp.eq.s32.totalorder %s17, 0
      %p71 = por %p69, %p70
      %p72 = scmp.ne.s32.totalorder %s60, %s61
      %p73 = scmp.eq.s32.totalorder %s18, 1
      %p74 = por %p72, %p73
      %p76 = scmp.ne.s32.totalorder %s61, %s75
      %p77 = scmp.eq.s32.totalorder %s18, 0
      %p78 = por %p76, %p77
      %s80 = sadd.s32 %s79, 1
      %p83 = scmp.eq.s32.totalorder %s12, 1
      %p84 = scmp.ne.s32.totalorder %s79, %s81
      %p85 = scmp.eq.s32.totalorder %s12, 0
      %p86 = por %p84, %p85
      %p87 = scmp.ne.s32.totalorder %s79, %s81
      %p88 = scmp.eq.s32.totalorder %s17, 1
      %p89 = por %p87, %p88
      %p90 = scmp.ne.s32.totalorder %s81, %s82
      %p91 = scmp.eq.s32.totalorder %s17, 0
      %p92 = por %p90, %p91
      %p93 = scmp.ne.s32.totalorder %s81, %s82
      %p94 = scmp.eq.s32.totalorder %s18, 1
      %p95 = por %p93, %p94
      %p97 = scmp.ne.s32.totalorder %s82, %s96
      %p98 = scmp.eq.s32.totalorder %s18, 0
      %p99 = por %p97, %p98
      %s100 = ssub.s32 %s19, %s31
      %s101 = ssub.s32 %s20, %s27
      %s102 = sor.u32 %s100, %s101
      %p103 = scmp.eq.s32.totalorder %s102, 0
      %s105 = sadd.s32 %s104, 1
      %s106 = scalar_select %p103, %s104, %s105
      %p109 = pneg %p103
      %p110 = scmp.eq.s32.totalorder %s12, 1
      %p111 = por %p109, %p110
      %p112 = scmp.ne.s32.totalorder %s104, %s107
      %p113 = scmp.eq.s32.totalorder %s12, 0
      %p114 = por %p112, %p113
      %p115 = scmp.ne.s32.totalorder %s104, %s107
      %p116 = scmp.eq.s32.totalorder %s17, 1
      %p117 = por %p115, %p116
      %p118 = scmp.ne.s32.totalorder %s107, %s108
      %p119 = scmp.eq.s32.totalorder %s17, 0
      %p120 = por %p118, %p119
      %p121 = scmp.ne.s32.totalorder %s107, %s108
      %p122 = scmp.eq.s32.totalorder %s18, 1
      %p123 = por %p121, %p122
      %p125 = scmp.ne.s32.totalorder %s108, %s124
      %p126 = scmp.eq.s32.totalorder %s18, 0
      %p127 = por %p125, %p126
      %p128 = scmp.le.s32.totalorder 1, %s12
      %p129 = scmp.lt.s32.totalorder %s12, 3
      %p130 = pnand %p128, %p129
      %p131 = pneg %p130
      // Predicated region
      $region9: #{tpu_custom_call.1} parent=5 // pred_check
        _
      $region10: #{tpu_custom_call.1} parent=5 // pred_check_branch
        %133 = sbr.rel (%p130) target = $region12
      $region11: #{tpu_custom_call.1} parent=5 // pred_region
        %s134 = ssub.s32 %s12, 1
        // Predicated region
        $region13: #{tpu_custom_call.1} parent=11 // pred_check
          %p135 = pneg %p71
        $region14: #{tpu_custom_call.1} parent=11 // pred_check_branch
          %137 = sbr.rel (%p135) target = $region16
        $region15: #{tpu_custom_call.1} parent=11 // pred_region
          _
        $region16: #{tpu_custom_call.1} parent=11 // pred_fallthru
          _
        // Predicated region
        $region17: #{tpu_custom_call.1} parent=11 // pred_check
          %p138 = pneg %p92
        $region18: #{tpu_custom_call.1} parent=11 // pred_check_branch
          %140 = sbr.rel (%p138) target = $region20
        $region19: #{tpu_custom_call.1} parent=11 // pred_region
          _
        $region20: #{tpu_custom_call.1} parent=11 // pred_fallthru
          _
      $region12: #{tpu_custom_call.1} parent=5 // pred_fallthru
        _
      %p141 = scmp.lt.s32.totalorder %s12, 2
      // Predicated region
      $region21: #{tpu_custom_call.1} parent=5 // pred_check
        %p142 = pneg %p141
      $region22: #{tpu_custom_call.1} parent=5 // pred_check_branch
        %144 = sbr.rel (%p142) target = $region24
      $region23: #{tpu_custom_call.1} parent=5 // pred_region
        // Predicated region
        $region25: #{tpu_custom_call.1} parent=23 // pred_check
          %p145 = pneg %p44
        $region26: #{tpu_custom_call.1} parent=23 // pred_check_branch
          %147 = sbr.rel (%p145) target = $region28
        $region27: #{tpu_custom_call.1} parent=23 // pred_region
          %p148 = scmp.lt.s32.totalorder %s19, 1
          %s149 = scalar_select %p148, %s19, 1
          %s150 = smul.addr %s149, 2
          %s151 = smul.addr %s150, 4
          %s152 = scalar_lea.vmem %s0, %s151
        $region28: #{tpu_custom_call.1} parent=23 // pred_fallthru
          _
      $region24: #{tpu_custom_call.1} parent=5 // pred_fallthru
        _
      %p153 = scmp.le.s32.totalorder 1, %s12
      %p154 = scmp.lt.s32.totalorder %s12, 3
      %p155 = pnand %p153, %p154
      %p156 = pneg %p155
      // Predicated region
      $region29: #{tpu_custom_call.1} parent=5 // pred_check
        _
      $region30: #{tpu_custom_call.1} parent=5 // pred_check_branch
        %158 = sbr.rel (%p155) target = $region32
      $region31: #{tpu_custom_call.1} parent=5 // pred_region
        %s159 = ssub.s32 %s12, 1
        %p160 = scmp.lt.s32.totalorder %s21, 1
        %s161 = scalar_select %p160, %s21, 1
        %s162 = smul.addr %s161, 2
        %s163 = smul.addr %s162, 4
        %s164 = scalar_lea.vmem %s0, %s163
        %p165 = pneg %p50
        %p166 = pneg %p47
        %p167 = pneg %p71
        %p168 = pneg %p68
        %p169 = pneg %p92
        %p170 = pneg %p89
        %p171 = pneg %p120
        %p172 = pneg %p117
        %s173 = sand.u32 %s107, 1
        %s174 = scalar_lea.sflag [#allocation4], %s173
        %s175 = sand.u32 %s107, 1
        %s176 = smul.addr %s175, 16
        %s177 = scalar_lea.vmem [#allocation3], %s176
        %p178 = scmp.lt.s32.totalorder %s21, 1
        %s179 = scalar_select %p178, %s21, 1
        %s180 = smul.addr %s179, 2
        %s181 = smul.addr %s180, 4
        %s182 = scalar_lea.vmem %s0, %s181
        %s183 = smul.u32 2, %s22
        %s184 = smul.u32 %s22, 256
        %vm185 = vcmask 1044344
        %186 = vst.msk [vmem:[#allocation2] sm:$0xf] %vm185, 0.0
        %vm187 = vcmask 134144
        %188 = vst.msk [vmem:[#allocation2 + $0xc] sm:$0xf] %vm187, 0.0
        %s189 = sshra.s32 %s184, 7
        %s190 = sand.u32 %s184, 127
        %s191 = smul.addr %s189, 4
        %s192 = scalar_lea.vmem %s182, %s191
        %v193 = vld [vmem:[%s192] sm:$0xff]
        %194 = vst [vmem:[#allocation2 + $0x4] sm:$0xff] %v193
        %v195 = vlaneseq
        %v196 = vand.u32 %v195, 127
        %v197 = vadd.s32 %v196, 128
        %vm198 = vcmp.lt.s32.totalorder %v196, 0
        %v199 = vsub.s32 0, %v196
        %v200 = vsel %vm198, %v199, %v196
        %v201 = vshrl.u32 %v200, 4
        %v202 = vand.u32 %v200, 15
        %v203 = vsub.s32 0, %v202
        %v204 = vsel %vm198, %v203, %v202
        %vm205 = vcmp.lt.s32.totalorder %v197, 0
        %v206 = vsub.s32 0, %v197
        %v207 = vsel %vm205, %v206, %v197
        %v208 = vshrl.u32 %v207, 4
        %v209 = vand.u32 %v207, 15
        %v210 = vsub.s32 0, %v209
        %v211 = vsel %vm205, %v210, %v209
        %vm212 = vcmp.ne.s32.totalorder %v204, 0
        %vm213 = vcmp.ne.s32.totalorder %v211, 0
        %vm214 = vcmp.lt.s32.totalorder %v204, 0
        %vm215 = vcmp.lt.s32.totalorder %v211, 0
        %vm216 = vmand %vm214, %vm212
        %vm217 = vmand %vm215, %vm213
        %v218 = vadd.s32 %v204, 16
        %v219 = vadd.s32 %v211, 16
        %v220 = vsel %vm216, %v218, %v204
        %v221 = vsel %vm217, %v219, %v211
        %vm222 = vcmp.ge.s32.totalorder %v220, 1
        %vm223 = vcmp.ge.s32.totalorder %v221, 1
        %vm224 = vcmp.le.s32.totalorder %v220, 14
        %vm225 = vcmp.le.s32.totalorder %v221, 14
        %v226 = vld [vmem:[%s2] sm:$0xff]
        %228 = vset.pattern.permute.xlu0 0
        %229 = vperm.xlu0 %228, %v226
        %v230 = vpop.permute.xlu0 %229
        %v232 = vadd.f32 %v230, 0.0
        %v233 = vld [vmem:[#allocation2] sm:$0xff]
        %v234 = vld [vmem:[#allocation2 + $0x8] sm:$0xf]
        %v235 = vsel %vm222, 1, 0
        %v236 = vsel %vm223, 1, 0
        %vm237 = vcmp.eq.s32.totalorder %v235, 1
        %vm238 = vcmp.eq.s32.totalorder %v236, 1
        %241 = vst [vmem:[#allocation1] ss:$2 sm:$0xff] %v233
        %s242 = scalar_lea.vmem [#allocation1], 16
        %243 = vst [vmem:[%s242] ss:$2 sm:$0xff] %v234
        %v244 = vld.sshfl [vmem:[#allocation1] sm:$0xff pattern:$0x75316420]
        %v245 = vld.sshfl [vmem:[#allocation1 + $0x8] sm:$0xff pattern:$0x75316420]
        %v246 = vld.sshfl [vmem:[#allocation1 + $0x10] sm:$0xff pattern:$0x75316420]
        %247 = vrot.lane.b32.xlu0 %v244, 17
        %v248 = vpop.permute.xlu0 %247
        %249 = vrot.lane.b32.xlu0 %v245, 17
        %v250 = vpop.permute.xlu0 %249
        %251 = vrot.lane.b32.xlu0 %v246, 17
        %v252 = vpop.permute.xlu0 %251
        %vm253 = vcmask 138240
        %v254 = vsel %vm253, %v248, %v250
        %v255 = vsel %vm253, %v250, %v252
        %v258 = vsel %vm237, %v254, 0.0
        %v259 = vsel %vm238, %v255, 0.0
        %v260 = vld [vmem:[%s1] sm:$0xff]
        %vm261 = vcmask 31744
        %v263 = vsel %vm261, %v260, 0
        %vm265 = vcmask 1043456
        %v267 = vsel %vm265, %v258, 0
        %v270 = vsel %vm265, %v259, 0
        %272 = vmatpush.msra.mxu0 0.0
        %273 = vmatpush.msra.mxu0 0.0
        %274 = vmatpush.msra.mxu0 0.0
        %275 = vmatpush.msra.mxu0 0.0
        %276 = vmatpush.msra.mxu0 0.0
        %277 = vmatpush.msra.mxu0 0.0
        %278 = vmatpush.msra.mxu0 0.0
        %279 = vmatpush.msra.mxu0 0.0
        %280 = vmatpush.msra.mxu0 0.0
        %281 = vmatpush.msra.mxu0 0.0
        %282 = vmatpush.msra.mxu0 0.0
        %283 = vmatpush.msra.mxu0 0.0
        %284 = vmatpush.msra.mxu0 0.0
        %285 = vmatpush.msra.mxu0 0.0
        %286 = vmatpush.msra.mxu0 0.0
        %287 = vmatpush.msra.mxu0 %v267
        %288 = vmatmul.f32.gmra.mxu0 %v263
        %v289 = vpop.f32.mrf.mxu0
        %v290 = vadd.f32 0.0, %v289
        %291 = vdwg.mxu0
        %292 = vmatpush.msra.mxu0 0.0
        %293 = vmatpush.msra.mxu0 0.0
        %294 = vmatpush.msra.mxu0 0.0
        %295 = vmatpush.msra.mxu0 0.0
        %296 = vmatpush.msra.mxu0 0.0
        %297 = vmatpush.msra.mxu0 0.0
        %298 = vmatpush.msra.mxu0 0.0
        %299 = vmatpush.msra.mxu0 0.0
        %300 = vmatpush.msra.mxu0 0.0
        %301 = vmatpush.msra.mxu0 0.0
        %302 = vmatpush.msra.mxu0 0.0
        %303 = vmatpush.msra.mxu0 0.0
        %304 = vmatpush.msra.mxu0 0.0
        %305 = vmatpush.msra.mxu0 0.0
        %306 = vmatpush.msra.mxu0 0.0
        %307 = vmatpush.msra.mxu0 %v270
        %308 = vmatmul.f32.gmra.mxu0 %v263
        %v309 = vpop.f32.mrf.mxu0
        %v310 = vadd.f32 0.0, %v309
        %311 = vdwg.mxu0
        %v312 = vadd.f32 %v232, %v290
        %v313 = vadd.f32 %v232, %v310
        %v314 = vld [vmem:[#allocation2] sm:$0xff]
        %v315 = vld [vmem:[#allocation2 + $0x8] sm:$0xf]
        %s316 = scalar_lea.vmem %s1, 8
        %v317 = vld [vmem:[%s316] sm:$0xff]
        %320 = vst [vmem:[#allocation1] ss:$2 sm:$0xff] %v314
        %s321 = scalar_lea.vmem [#allocation1], 16
        %322 = vst [vmem:[%s321] ss:$2 sm:$0xff] %v315
        %v323 = vld.sshfl [vmem:[#allocation1] sm:$0xff pattern:$0x75316420]
        %v324 = vld.sshfl [vmem:[#allocation1 + $0x8] sm:$0xff pattern:$0x75316420]
        %v325 = vld.sshfl [vmem:[#allocation1 + $0x10] sm:$0xff pattern:$0x75316420]
        %326 = vrot.lane.b32.xlu0 %v323, 16
        %v327 = vpop.permute.xlu0 %326
        %328 = vrot.lane.b32.xlu0 %v324, 16
        %v329 = vpop.permute.xlu0 %328
        %330 = vrot.lane.b32.xlu0 %v325, 16
        %v331 = vpop.permute.xlu0 %330
        %vm332 = vcmask 130048
        %v333 = vsel %vm332, %v327, %v329
        %v334 = vsel %vm332, %v329, %v331
        %v336 = vsel %vm261, %v317, 0
        %v338 = vsel %vm265, %v333, 0
        %v340 = vsel %vm265, %v334, 0
        %342 = vmatpush.msra.mxu0 0.0
        %343 = vmatpush.msra.mxu0 0.0
        %344 = vmatpush.msra.mxu0 0.0
        %345 = vmatpush.msra.mxu0 0.0
        %346 = vmatpush.msra.mxu0 0.0
        %347 = vmatpush.msra.mxu0 0.0
        %348 = vmatpush.msra.mxu0 0.0
        %349 = vmatpush.msra.mxu0 0.0
        %350 = vmatpush.msra.mxu0 0.0
        %351 = vmatpush.msra.mxu0 0.0
        %352 = vmatpush.msra.mxu0 0.0
        %353 = vmatpush.msra.mxu0 0.0
        %354 = vmatpush.msra.mxu0 0.0
        %355 = vmatpush.msra.mxu0 0.0
        %356 = vmatpush.msra.mxu0 0.0
        %357 = vmatpush.msra.mxu0 %v338
        %358 = vmatmul.f32.gmra.mxu0 %v336
        %v359 = vpop.f32.mrf.mxu0
        %v360 = vadd.f32 0.0, %v359
        %361 = vdwg.mxu0
        %362 = vmatpush.msra.mxu0 0.0
        %363 = vmatpush.msra.mxu0 0.0
        %364 = vmatpush.msra.mxu0 0.0
        %365 = vmatpush.msra.mxu0 0.0
        %366 = vmatpush.msra.mxu0 0.0
        %367 = vmatpush.msra.mxu0 0.0
        %368 = vmatpush.msra.mxu0 0.0
        %369 = vmatpush.msra.mxu0 0.0
        %370 = vmatpush.msra.mxu0 0.0
        %371 = vmatpush.msra.mxu0 0.0
        %372 = vmatpush.msra.mxu0 0.0
        %373 = vmatpush.msra.mxu0 0.0
        %374 = vmatpush.msra.mxu0 0.0
        %375 = vmatpush.msra.mxu0 0.0
        %376 = vmatpush.msra.mxu0 0.0
        %377 = vmatpush.msra.mxu0 %v340
        %378 = vmatmul.f32.gmra.mxu0 %v336
        %v379 = vpop.f32.mrf.mxu0
        %v380 = vadd.f32 0.0, %v379
        %381 = vdwg.mxu0
        %v382 = vadd.f32 %v312, %v360
        %v383 = vadd.f32 %v313, %v380
        %v384 = vld [vmem:[#allocation2] sm:$0xff]
        %v385 = vld [vmem:[#allocation2 + $0x8] sm:$0xf]
        %v386 = vsel %vm224, 1, 0
        %v387 = vsel %vm225, 1, 0
        %vm388 = vcmp.eq.s32.totalorder %v386, 1
        %vm389 = vcmp.eq.s32.totalorder %v387, 1
        %392 = vst [vmem:[#allocation1] ss:$2 sm:$0xff] %v384
        %s393 = scalar_lea.vmem [#allocation1], 16
        %394 = vst [vmem:[%s393] ss:$2 sm:$0xff] %v385
        %v395 = vld.sshfl [vmem:[#allocation1] sm:$0xff pattern:$0x75316420]
        %v396 = vld.sshfl [vmem:[#allocation1 + $0x8] sm:$0xff pattern:$0x75316420]
        %v397 = vld.sshfl [vmem:[#allocation1 + $0x10] sm:$0xff pattern:$0x75316420]
        %398 = vrot.lane.b32.xlu0 %v395, 15
        %v399 = vpop.permute.xlu0 %398
        %400 = vrot.lane.b32.xlu0 %v396, 15
        %v401 = vpop.permute.xlu0 %400
        %402 = vrot.lane.b32.xlu0 %v397, 15
        %v403 = vpop.permute.xlu0 %402
        %vm404 = vcmask 121856
        %v405 = vsel %vm404, %v399, %v401
        %v406 = vsel %vm404, %v401, %v403
        %v409 = vsel %vm388, %v405, 0.0
        %v410 = vsel %vm389, %v406, 0.0
        %s411 = scalar_lea.vmem %s1, 16
        %v412 = vld [vmem:[%s411] sm:$0xff]
        %v414 = vsel %vm261, %v412, 0
        %v417 = vsel %vm265, %v409, 0
        %v420 = vsel %vm265, %v410, 0
        %422 = vmatpush.msra.mxu0 0.0
        %423 = vmatpush.msra.mxu0 0.0
        %424 = vmatpush.msra.mxu0 0.0
        %425 = vmatpush.msra.mxu0 0.0
        %426 = vmatpush.msra.mxu0 0.0
        %427 = vmatpush.msra.mxu0 0.0
        %428 = vmatpush.msra.mxu0 0.0
        %429 = vmatpush.msra.mxu0 0.0
        %430 = vmatpush.msra.mxu0 0.0
        %431 = vmatpush.msra.mxu0 0.0
        %432 = vmatpush.msra.mxu0 0.0
        %433 = vmatpush.msra.mxu0 0.0
        %434 = vmatpush.msra.mxu0 0.0
        %435 = vmatpush.msra.mxu0 0.0
        %436 = vmatpush.msra.mxu0 0.0
        %437 = vmatpush.msra.mxu0 %v417
        %438 = vmatmul.f32.gmra.mxu0 %v414
        %v439 = vpop.f32.mrf.mxu0
        %v440 = vadd.f32 0.0, %v439
        %441 = vdwg.mxu0
        %442 = vmatpush.msra.mxu0 0.0
        %443 = vmatpush.msra.mxu0 0.0
        %444 = vmatpush.msra.mxu0 0.0
        %445 = vmatpush.msra.mxu0 0.0
        %446 = vmatpush.msra.mxu0 0.0
        %447 = vmatpush.msra.mxu0 0.0
        %448 = vmatpush.msra.mxu0 0.0
        %449 = vmatpush.msra.mxu0 0.0
        %450 = vmatpush.msra.mxu0 0.0
        %451 = vmatpush.msra.mxu0 0.0
        %452 = vmatpush.msra.mxu0 0.0
        %453 = vmatpush.msra.mxu0 0.0
        %454 = vmatpush.msra.mxu0 0.0
        %455 = vmatpush.msra.mxu0 0.0
        %456 = vmatpush.msra.mxu0 0.0
        %457 = vmatpush.msra.mxu0 %v420
        %458 = vmatmul.f32.gmra.mxu0 %v414
        %v459 = vpop.f32.mrf.mxu0
        %v460 = vadd.f32 0.0, %v459
        %461 = vdwg.mxu0
        %v462 = vadd.f32 %v382, %v440
        %v463 = vadd.f32 %v383, %v460
        %v464 = vld [vmem:[#allocation2] sm:$0xff]
        %v465 = vld [vmem:[#allocation2 + $0x8] sm:$0xf]
        %468 = vst [vmem:[#allocation1] ss:$2 sm:$0xff] %v464
        %s469 = scalar_lea.vmem [#allocation1], 16
        %470 = vst [vmem:[%s469] ss:$2 sm:$0xff] %v465
        %v471 = vld.sshfl [vmem:[#allocation1] sm:$0xff pattern:$0x75316420]
        %v472 = vld.sshfl [vmem:[#allocation1 + $0x8] sm:$0xff pattern:$0x75316420]
        %v473 = vld.sshfl [vmem:[#allocation1 + $0x10] sm:$0xff pattern:$0x75316420]
        %474 = vrot.lane.b32.xlu0 %v471, 1
        %v475 = vpop.permute.xlu0 %474
        %476 = vrot.lane.b32.xlu0 %v472, 1
        %v477 = vpop.permute.xlu0 %476
        %478 = vrot.lane.b32.xlu0 %v473, 1
        %v479 = vpop.permute.xlu0 %478
        %vm480 = vcmask 7168
        %v481 = vsel %vm480, %v475, %v477
        %v482 = vsel %vm480, %v477, %v479
        %v485 = vsel %vm237, %v481, 0.0
        %v486 = vsel %vm238, %v482, 0.0
        %s487 = scalar_lea.vmem %s1, 24
        %v488 = vld [vmem:[%s487] sm:$0xff]
        %v490 = vsel %vm261, %v488, 0
        %v493 = vsel %vm265, %v485, 0
        %v496 = vsel %vm265, %v486, 0
        %498 = vmatpush.msra.mxu0 0.0
        %499 = vmatpush.msra.mxu0 0.0
        %500 = vmatpush.msra.mxu0 0.0
        %501 = vmatpush.msra.mxu0 0.0
        %502 = vmatpush.msra.mxu0 0.0
        %503 = vmatpush.msra.mxu0 0.0
        %504 = vmatpush.msra.mxu0 0.0
        %505 = vmatpush.msra.mxu0 0.0
        %506 = vmatpush.msra.mxu0 0.0
        %507 = vmatpush.msra.mxu0 0.0
        %508 = vmatpush.msra.mxu0 0.0
        %509 = vmatpush.msra.mxu0 0.0
        %510 = vmatpush.msra.mxu0 0.0
        %511 = vmatpush.msra.mxu0 0.0
        %512 = vmatpush.msra.mxu0 0.0
        %513 = vmatpush.msra.mxu0 %v493
        %514 = vmatmul.f32.gmra.mxu0 %v490
        %v515 = vpop.f32.mrf.mxu0
        %v516 = vadd.f32 0.0, %v515
        %517 = vdwg.mxu0
        %518 = vmatpush.msra.mxu0 0.0
        %519 = vmatpush.msra.mxu0 0.0
        %520 = vmatpush.msra.mxu0 0.0
        %521 = vmatpush.msra.mxu0 0.0
        %522 = vmatpush.msra.mxu0 0.0
        %523 = vmatpush.msra.mxu0 0.0
        %524 = vmatpush.msra.mxu0 0.0
        %525 = vmatpush.msra.mxu0 0.0
        %526 = vmatpush.msra.mxu0 0.0
        %527 = vmatpush.msra.mxu0 0.0
        %528 = vmatpush.msra.mxu0 0.0
        %529 = vmatpush.msra.mxu0 0.0
        %530 = vmatpush.msra.mxu0 0.0
        %531 = vmatpush.msra.mxu0 0.0
        %532 = vmatpush.msra.mxu0 0.0
        %533 = vmatpush.msra.mxu0 %v496
        %534 = vmatmul.f32.gmra.mxu0 %v490
        %v535 = vpop.f32.mrf.mxu0
        %v536 = vadd.f32 0.0, %v535
        %537 = vdwg.mxu0
        %v538 = vadd.f32 %v462, %v516
        %v539 = vadd.f32 %v463, %v536
        %v540 = vld [vmem:[#allocation2 + $0x4] sm:$0xff]
        %s541 = scalar_lea.vmem %s1, 32
        %v542 = vld [vmem:[%s541] sm:$0xff]
        %544 = vst [vmem:[#allocation1] ss:$2 sm:$0xff] %v540
        %v545 = vld.sshfl [vmem:[#allocation1] sm:$0xff pattern:$0x75316420]
        %v546 = vld.sshfl [vmem:[#allocation1 + $0x8] sm:$0xff pattern:$0x75316420]
        %v548 = vsel %vm261, %v542, 0
        %v550 = vsel %vm265, %v545, 0
        %v552 = vsel %vm265, %v546, 0
        %554 = vmatpush.msra.mxu0 0.0
        %555 = vmatpush.msra.mxu0 0.0
        %556 = vmatpush.msra.mxu0 0.0
        %557 = vmatpush.msra.mxu0 0.0
        %558 = vmatpush.msra.mxu0 0.0
        %559 = vmatpush.msra.mxu0 0.0
        %560 = vmatpush.msra.mxu0 0.0
        %561 = vmatpush.msra.mxu0 0.0
        %562 = vmatpush.msra.mxu0 0.0
        %563 = vmatpush.msra.mxu0 0.0
        %564 = vmatpush.msra.mxu0 0.0
        %565 = vmatpush.msra.mxu0 0.0
        %566 = vmatpush.msra.mxu0 0.0
        %567 = vmatpush.msra.mxu0 0.0
        %568 = vmatpush.msra.mxu0 0.0
        %569 = vmatpush.msra.mxu0 %v550
        %570 = vmatmul.f32.gmra.mxu0 %v548
        %v571 = vpop.f32.mrf.mxu0
        %v572 = vadd.f32 0.0, %v571
        %573 = vdwg.mxu0
        %574 = vmatpush.msra.mxu0 0.0
        %575 = vmatpush.msra.mxu0 0.0
        %576 = vmatpush.msra.mxu0 0.0
        %577 = vmatpush.msra.mxu0 0.0
        %578 = vmatpush.msra.mxu0 0.0
        %579 = vmatpush.msra.mxu0 0.0
        %580 = vmatpush.msra.mxu0 0.0
        %581 = vmatpush.msra.mxu0 0.0
        %582 = vmatpush.msra.mxu0 0.0
        %583 = vmatpush.msra.mxu0 0.0
        %584 = vmatpush.msra.mxu0 0.0
        %585 = vmatpush.msra.mxu0 0.0
        %586 = vmatpush.msra.mxu0 0.0
        %587 = vmatpush.msra.mxu0 0.0
        %588 = vmatpush.msra.mxu0 0.0
        %589 = vmatpush.msra.mxu0 %v552
        %590 = vmatmul.f32.gmra.mxu0 %v548
        %v591 = vpop.f32.mrf.mxu0
        %v592 = vadd.f32 0.0, %v591
        %593 = vdwg.mxu0
        %v594 = vadd.f32 %v538, %v572
        %v595 = vadd.f32 %v539, %v592
        %v596 = vld [vmem:[#allocation2 + $0x4] sm:$0xff]
        %v597 = vld [vmem:[#allocation2 + $0xc] sm:$0xf]
        %600 = vst [vmem:[#allocation1] ss:$2 sm:$0xff] %v596
        %s601 = scalar_lea.vmem [#allocation1], 16
        %602 = vst [vmem:[%s601] ss:$2 sm:$0xff] %v597
        %v603 = vld.sshfl [vmem:[#allocation1] sm:$0xff pattern:$0x75316420]
        %v604 = vld.sshfl [vmem:[#allocation1 + $0x8] sm:$0xff pattern:$0x75316420]
        %v605 = vld.sshfl [vmem:[#allocation1 + $0x10] sm:$0xff pattern:$0x75316420]
        %606 = vrot.lane.b32.xlu0 %v603, 127
        %v607 = vpop.permute.xlu0 %606
        %608 = vrot.lane.b32.xlu0 %v604, 127
        %v609 = vpop.permute.xlu0 %608
        %610 = vrot.lane.b32.xlu0 %v605, 127
        %v611 = vpop.permute.xlu0 %610
        %vm612 = vcmask 1039360
        %v613 = vsel %vm612, %v607, %v609
        %v614 = vsel %vm612, %v609, %v611
        %v617 = vsel %vm388, %v613, 0.0
        %v618 = vsel %vm389, %v614, 0.0
        %s619 = scalar_lea.vmem %s1, 40
        %v620 = vld [vmem:[%s619] sm:$0xff]
        %v622 = vsel %vm261, %v620, 0
        %v625 = vsel %vm265, %v617, 0
        %v628 = vsel %vm265, %v618, 0
        %630 = vmatpush.msra.mxu0 0.0
        %631 = vmatpush.msra.mxu0 0.0
        %632 = vmatpush.msra.mxu0 0.0
        %633 = vmatpush.msra.mxu0 0.0
        %634 = vmatpush.msra.mxu0 0.0
        %635 = vmatpush.msra.mxu0 0.0
        %636 = vmatpush.msra.mxu0 0.0
        %637 = vmatpush.msra.mxu0 0.0
        %638 = vmatpush.msra.mxu0 0.0
        %639 = vmatpush.msra.mxu0 0.0
        %640 = vmatpush.msra.mxu0 0.0
        %641 = vmatpush.msra.mxu0 0.0
        %642 = vmatpush.msra.mxu0 0.0
        %643 = vmatpush.msra.mxu0 0.0
        %644 = vmatpush.msra.mxu0 0.0
        %645 = vmatpush.msra.mxu0 %v625
        %646 = vmatmul.f32.gmra.mxu0 %v622
        %v647 = vpop.f32.mrf.mxu0
        %v648 = vadd.f32 0.0, %v647
        %649 = vdwg.mxu0
        %650 = vmatpush.msra.mxu0 0.0
        %651 = vmatpush.msra.mxu0 0.0
        %652 = vmatpush.msra.mxu0 0.0
        %653 = vmatpush.msra.mxu0 0.0
        %654 = vmatpush.msra.mxu0 0.0
        %655 = vmatpush.msra.mxu0 0.0
        %656 = vmatpush.msra.mxu0 0.0
        %657 = vmatpush.msra.mxu0 0.0
        %658 = vmatpush.msra.mxu0 0.0
        %659 = vmatpush.msra.mxu0 0.0
        %660 = vmatpush.msra.mxu0 0.0
        %661 = vmatpush.msra.mxu0 0.0
        %662 = vmatpush.msra.mxu0 0.0
        %663 = vmatpush.msra.mxu0 0.0
        %664 = vmatpush.msra.mxu0 0.0
        %665 = vmatpush.msra.mxu0 %v628
        %666 = vmatmul.f32.gmra.mxu0 %v622
        %v667 = vpop.f32.mrf.mxu0
        %v668 = vadd.f32 0.0, %v667
        %669 = vdwg.mxu0
        %v670 = vadd.f32 %v594, %v648
        %v671 = vadd.f32 %v595, %v668
        %v672 = vld [vmem:[#allocation2 + $0x4] sm:$0xff]
        %v673 = vld [vmem:[#allocation2 + $0xc] sm:$0xf]
        %676 = vst [vmem:[#allocation1] ss:$2 sm:$0xff] %v672
        %s677 = scalar_lea.vmem [#allocation1], 16
        %678 = vst [vmem:[%s677] ss:$2 sm:$0xff] %v673
        %v679 = vld.sshfl [vmem:[#allocation1] sm:$0xff pattern:$0x75316420]
        %v680 = vld.sshfl [vmem:[#allocation1 + $0x8] sm:$0xff pattern:$0x75316420]
        %v681 = vld.sshfl [vmem:[#allocation1 + $0x10] sm:$0xff pattern:$0x75316420]
        %682 = vrot.lane.b32.xlu0 %v679, 113
        %v683 = vpop.permute.xlu0 %682
        %684 = vrot.lane.b32.xlu0 %v680, 113
        %v685 = vpop.permute.xlu0 %684
        %686 = vrot.lane.b32.xlu0 %v681, 113
        %v687 = vpop.permute.xlu0 %686
        %vm688 = vcmask 924672
        %v689 = vsel %vm688, %v683, %v685
        %v690 = vsel %vm688, %v685, %v687
        %v693 = vsel %vm237, %v689, 0.0
        %v694 = vsel %vm238, %v690, 0.0
        %s695 = scalar_lea.vmem %s1, 48
        %v696 = vld [vmem:[%s695] sm:$0xff]
        %v698 = vsel %vm261, %v696, 0
        %v701 = vsel %vm265, %v693, 0
        %v704 = vsel %vm265, %v694, 0
        %706 = vmatpush.msra.mxu0 0.0
        %707 = vmatpush.msra.mxu0 0.0
        %708 = vmatpush.msra.mxu0 0.0
        %709 = vmatpush.msra.mxu0 0.0
        %710 = vmatpush.msra.mxu0 0.0
        %711 = vmatpush.msra.mxu0 0.0
        %712 = vmatpush.msra.mxu0 0.0
        %713 = vmatpush.msra.mxu0 0.0
        %714 = vmatpush.msra.mxu0 0.0
        %715 = vmatpush.msra.mxu0 0.0
        %716 = vmatpush.msra.mxu0 0.0
        %717 = vmatpush.msra.mxu0 0.0
        %718 = vmatpush.msra.mxu0 0.0
        %719 = vmatpush.msra.mxu0 0.0
        %720 = vmatpush.msra.mxu0 0.0
        %721 = vmatpush.msra.mxu0 %v701
        %722 = vmatmul.f32.gmra.mxu0 %v698
        %v723 = vpop.f32.mrf.mxu0
        %v724 = vadd.f32 0.0, %v723
        %725 = vdwg.mxu0
        %726 = vmatpush.msra.mxu0 0.0
        %727 = vmatpush.msra.mxu0 0.0
        %728 = vmatpush.msra.mxu0 0.0
        %729 = vmatpush.msra.mxu0 0.0
        %730 = vmatpush.msra.mxu0 0.0
        %731 = vmatpush.msra.mxu0 0.0
        %732 = vmatpush.msra.mxu0 0.0
        %733 = vmatpush.msra.mxu0 0.0
        %734 = vmatpush.msra.mxu0 0.0
        %735 = vmatpush.msra.mxu0 0.0
        %736 = vmatpush.msra.mxu0 0.0
        %737 = vmatpush.msra.mxu0 0.0
        %738 = vmatpush.msra.mxu0 0.0
        %739 = vmatpush.msra.mxu0 0.0
        %740 = vmatpush.msra.mxu0 0.0
        %741 = vmatpush.msra.mxu0 %v704
        %742 = vmatmul.f32.gmra.mxu0 %v698
        %v743 = vpop.f32.mrf.mxu0
        %v744 = vadd.f32 0.0, %v743
        %745 = vdwg.mxu0
        %v746 = vadd.f32 %v670, %v724
        %v747 = vadd.f32 %v671, %v744
        %v748 = vld [vmem:[#allocation2 + $0x4] sm:$0xff]
        %v749 = vld [vmem:[#allocation2 + $0xc] sm:$0xf]
        %s750 = scalar_lea.vmem %s1, 56
        %v751 = vld [vmem:[%s750] sm:$0xff]
        %754 = vst [vmem:[#allocation1] ss:$2 sm:$0xff] %v748
        %s755 = scalar_lea.vmem [#allocation1], 16
        %756 = vst [vmem:[%s755] ss:$2 sm:$0xff] %v749
        %v757 = vld.sshfl [vmem:[#allocation1] sm:$0xff pattern:$0x75316420]
        %v758 = vld.sshfl [vmem:[#allocation1 + $0x8] sm:$0xff pattern:$0x75316420]
        %v759 = vld.sshfl [vmem:[#allocation1 + $0x10] sm:$0xff pattern:$0x75316420]
        %760 = vrot.lane.b32.xlu0 %v757, 112
        %v761 = vpop.permute.xlu0 %760
        %762 = vrot.lane.b32.xlu0 %v758, 112
        %v763 = vpop.permute.xlu0 %762
        %764 = vrot.lane.b32.xlu0 %v759, 112
        %v765 = vpop.permute.xlu0 %764
        %vm766 = vcmask 916480
        %v767 = vsel %vm766, %v761, %v763
        %v768 = vsel %vm766, %v763, %v765
        %v770 = vsel %vm261, %v751, 0
        %v772 = vsel %vm265, %v767, 0
        %v774 = vsel %vm265, %v768, 0
        %776 = vmatpush.msra.mxu0 0.0
        %777 = vmatpush.msra.mxu0 0.0
        %778 = vmatpush.msra.mxu0 0.0
        %779 = vmatpush.msra.mxu0 0.0
        %780 = vmatpush.msra.mxu0 0.0
        %781 = vmatpush.msra.mxu0 0.0
        %782 = vmatpush.msra.mxu0 0.0
        %783 = vmatpush.msra.mxu0 0.0
        %784 = vmatpush.msra.mxu0 0.0
        %785 = vmatpush.msra.mxu0 0.0
        %786 = vmatpush.msra.mxu0 0.0
        %787 = vmatpush.msra.mxu0 0.0
        %788 = vmatpush.msra.mxu0 0.0
        %789 = vmatpush.msra.mxu0 0.0
        %790 = vmatpush.msra.mxu0 0.0
        %791 = vmatpush.msra.mxu0 %v772
        %792 = vmatmul.f32.gmra.mxu0 %v770
        %v793 = vpop.f32.mrf.mxu0
        %v794 = vadd.f32 0.0, %v793
        %795 = vdwg.mxu0
        %796 = vmatpush.msra.mxu0 0.0
        %797 = vmatpush.msra.mxu0 0.0
        %798 = vmatpush.msra.mxu0 0.0
        %799 = vmatpush.msra.mxu0 0.0
        %800 = vmatpush.msra.mxu0 0.0
        %801 = vmatpush.msra.mxu0 0.0
        %802 = vmatpush.msra.mxu0 0.0
        %803 = vmatpush.msra.mxu0 0.0
        %804 = vmatpush.msra.mxu0 0.0
        %805 = vmatpush.msra.mxu0 0.0
        %806 = vmatpush.msra.mxu0 0.0
        %807 = vmatpush.msra.mxu0 0.0
        %808 = vmatpush.msra.mxu0 0.0
        %809 = vmatpush.msra.mxu0 0.0
        %810 = vmatpush.msra.mxu0 0.0
        %811 = vmatpush.msra.mxu0 %v774
        %812 = vmatmul.f32.gmra.mxu0 %v770
        %v813 = vpop.f32.mrf.mxu0
        %v814 = vadd.f32 0.0, %v813
        %815 = vdwg.mxu0
        %v816 = vadd.f32 %v746, %v794
        %v817 = vadd.f32 %v747, %v814
        %v818 = vld [vmem:[#allocation2 + $0x4] sm:$0xff]
        %v819 = vld [vmem:[#allocation2 + $0xc] sm:$0xf]
        %822 = vst [vmem:[#allocation1] ss:$2 sm:$0xff] %v818
        %s823 = scalar_lea.vmem [#allocation1], 16
        %824 = vst [vmem:[%s823] ss:$2 sm:$0xff] %v819
        %v825 = vld.sshfl [vmem:[#allocation1] sm:$0xff pattern:$0x75316420]
        %v826 = vld.sshfl [vmem:[#allocation1 + $0x8] sm:$0xff pattern:$0x75316420]
        %v827 = vld.sshfl [vmem:[#allocation1 + $0x10] sm:$0xff pattern:$0x75316420]
        %828 = vrot.lane.b32.xlu0 %v825, 111
        %v829 = vpop.permute.xlu0 %828
        %830 = vrot.lane.b32.xlu0 %v826, 111
        %v831 = vpop.permute.xlu0 %830
        %832 = vrot.lane.b32.xlu0 %v827, 111
        %v833 = vpop.permute.xlu0 %832
        %vm834 = vcmask 908288
        %v835 = vsel %vm834, %v829, %v831
        %v836 = vsel %vm834, %v831, %v833
        %v839 = vsel %vm388, %v835, 0.0
        %v840 = vsel %vm389, %v836, 0.0
        %s841 = scalar_lea.vmem %s1, 64
        %v842 = vld [vmem:[%s841] sm:$0xff]
        %v844 = vsel %vm261, %v842, 0
        %v847 = vsel %vm265, %v839, 0
        %v850 = vsel %vm265, %v840, 0
        %852 = vmatpush.msra.mxu0 0.0
        %853 = vmatpush.msra.mxu0 0.0
        %854 = vmatpush.msra.mxu0 0.0
        %855 = vmatpush.msra.mxu0 0.0
        %856 = vmatpush.msra.mxu0 0.0
        %857 = vmatpush.msra.mxu0 0.0
        %858 = vmatpush.msra.mxu0 0.0
        %859 = vmatpush.msra.mxu0 0.0
        %860 = vmatpush.msra.mxu0 0.0
        %861 = vmatpush.msra.mxu0 0.0
        %862 = vmatpush.msra.mxu0 0.0
        %863 = vmatpush.msra.mxu0 0.0
        %864 = vmatpush.msra.mxu0 0.0
        %865 = vmatpush.msra.mxu0 0.0
        %866 = vmatpush.msra.mxu0 0.0
        %867 = vmatpush.msra.mxu0 %v847
        %868 = vmatmul.f32.gmra.mxu0 %v844
        %v869 = vpop.f32.mrf.mxu0
        %v870 = vadd.f32 0.0, %v869
        %871 = vdwg.mxu0
        %872 = vmatpush.msra.mxu0 0.0
        %873 = vmatpush.msra.mxu0 0.0
        %874 = vmatpush.msra.mxu0 0.0
        %875 = vmatpush.msra.mxu0 0.0
        %876 = vmatpush.msra.mxu0 0.0
        %877 = vmatpush.msra.mxu0 0.0
        %878 = vmatpush.msra.mxu0 0.0
        %879 = vmatpush.msra.mxu0 0.0
        %880 = vmatpush.msra.mxu0 0.0
        %881 = vmatpush.msra.mxu0 0.0
        %882 = vmatpush.msra.mxu0 0.0
        %883 = vmatpush.msra.mxu0 0.0
        %884 = vmatpush.msra.mxu0 0.0
        %885 = vmatpush.msra.mxu0 0.0
        %886 = vmatpush.msra.mxu0 0.0
        %887 = vmatpush.msra.mxu0 %v850
        %888 = vmatmul.f32.gmra.mxu0 %v844
        %v889 = vpop.f32.mrf.mxu0
        %v890 = vadd.f32 0.0, %v889
        %891 = vdwg.mxu0
        %v892 = vadd.f32 %v816, %v870
        %v893 = vadd.f32 %v817, %v890
        %894 = vst [vmem:[%s177] sm:$0xff] %v892
        %895 = vst [vmem:[%s177 + $0x8] sm:$0xff] %v893
        %s896 = sand.u32 %s107, 1
        %s897 = scalar_lea.sflag [#allocation4], %s896
        %s898 = sand.u32 %s107, 1
        %s899 = smul.addr %s898, 16
        %s900 = scalar_lea.vmem [#allocation3], %s899
        // Predicated region
        $region33: #{tpu_custom_call.1} parent=31 // pred_check
          %p901 = pneg %p117
        $region34: #{tpu_custom_call.1} parent=31 // pred_check_branch
          %903 = sbr.rel (%p901) target = $region36
        $region35: #{tpu_custom_call.1} parent=31 // pred_region
          %s904 = smul.u32 2, %s22
          %906 = vsyncadd %s897, 0
          %s907 = smul.addr %s21, 2
          %s908 = sadd.s32 %s904, %s907
          %s909 = smul.addr %s908, 8
          %s910 = scalar_lea.hbm %s3, %s909
          %s912 = sshll.u32 %s900, 4
          %s913 = int_to_ptr.vmem [resolvable:$true] %s912
          %s914 = sshll.u32 %s910, 4
          %s915 = int_to_ptr.hbm [resolvable:$true] %s914
          %917 = dma.vmem_to_hbm [thread:$0]  %s913, 256, %s915, %s897
        $region36: #{tpu_custom_call.1} parent=31 // pred_fallthru
          _
      $region32: #{tpu_custom_call.1} parent=5 // pred_fallthru
        _
      %p918 = scmp.le.s32.totalorder 2, %s12
      // Predicated region
      $region37: #{tpu_custom_call.1} parent=5 // pred_check
        %p919 = pneg %p918
      $region38: #{tpu_custom_call.1} parent=5 // pred_check_branch
        %921 = sbr.rel (%p919) target = $region40
      $region39: #{tpu_custom_call.1} parent=5 // pred_region
        %s922 = ssub.s32 %s12, 2
        // Predicated region
        $region41: #{tpu_custom_call.1} parent=39 // pred_check
          %p923 = pneg %p123
        $region42: #{tpu_custom_call.1} parent=39 // pred_check_branch
          %925 = sbr.rel (%p923) target = $region44
        $region43: #{tpu_custom_call.1} parent=39 // pred_region
          %s926 = sand.u32 %s108, 1
          %s927 = scalar_lea.sflag [#allocation4], %s926
          %s928 = sand.u32 %s108, 1
          %s929 = smul.addr %s928, 16
          %s930 = scalar_lea.vmem [#allocation3], %s929
          %932 = dma.done %s927, 256
        $region44: #{tpu_custom_call.1} parent=39 // pred_fallthru
          _
      $region40: #{tpu_custom_call.1} parent=5 // pred_fallthru
        _
    $region6: #{tpu_custom_call.1} parent=1 // loop_footer
      %s16 = sadd.s32 1, %s12
    $region7: #{tpu_custom_call.1} parent=1 // loop_footer_branch
      %11 = sbr.rel target = $region3
    $region8: #{tpu_custom_call.1} parent=1 // loop_exit
      _
    %933 = vsyncpa [#allocation4], 1
    %s934 = scalar_lea.sflag [#allocation4], 1
    %935 = vsyncpa %s934, 1

</llo_original>
